<compile_context>
chip_gen: v7x
topology: tpu7x:2x2x1
jax: 0.10.0
libtpu: 0.0.40
codegen_flags: <defaults>
</compile_context>

<pallas_src>
import jax
import jax.numpy as jnp
from jax.experimental import pallas as pl
from jax.experimental.pallas import tpu as pltpu

_SLOPE = 0.1  # the PyTorch module uses F.leaky_relu(..., 0.1)


def _leaky_relu(x):
    # max(x, 0.1*x) == leaky_relu(x, 0.1): one VPU max + one mul.
    return jnp.maximum(x, _SLOPE * x)


def _make_kernel(tb, hot, dim):
    """Kernel closure over static tile sizes (tb batch rows per step, hot, dim)."""

    def kernel(x_ref, w_emb_ref, w_dec_ref, wc_ref, bc_ref, wd_ref, bd_ref,
               bdec_ref, dec_ref, emb_ref, de_ref, comb_ref):
        f32 = jnp.float32

        # Encoder: per-(batch, hot) row linear; hot is folded into the row axis.
        x = x_ref[...]                                                 # (tb*hot, num) bf16
        xe = jnp.dot(x, w_emb_ref[...], preferred_element_type=f32)    # (tb*hot, dim) f32
        xe = _leaky_relu(xe)
        emb_ref[...] = xe.astype(emb_ref.dtype)

        # Combine over hot (rank-1): weighted sublane reduction, no MXU pass.
        xe3 = xe.reshape(tb, hot, dim)                                 # free split (hot=8-aligned)
        comb = jnp.sum(xe3 * wc_ref[...].reshape(1, hot, dim), axis=1)
        comb = comb + bc_ref[...]                                      # (tb, dim)
        comb_ref[...] = comb.astype(comb_ref.dtype)

        # Divide back to hot slots (rank-1 broadcast MAC) + leaky_relu.
        de3 = _leaky_relu(comb[:, None, :] * wd_ref[...].reshape(1, hot, dim)
                          + bd_ref[...].reshape(1, hot, dim))          # (tb, hot, dim)
        de = de3.reshape(tb * hot, dim)
        de_ref[...] = de.astype(de_ref.dtype)

        # Decoder: per-row linear back to embedding_num.
        dec = jnp.dot(de.astype(w_dec_ref.dtype), w_dec_ref[...],
                      preferred_element_type=f32)                      # (tb*hot, num) f32
        dec_ref[...] = (dec + bdec_ref[...]).astype(dec_ref.dtype)

    return kernel


def graph_embedding2_forward(x, params, *, block_b=1024,
                             compute_dtype=jnp.bfloat16,
                             vmem_budget_bytes=40 * 1024 * 1024):
    """Forward pass of graph_embedding2.

    x:      (B, hot_num, embedding_num) multi-hot features.
    params: dict from init_params (PyTorch nn.Linear weight shapes).
    Returns (x_decoder, x_embedding, x_de_embedding, x_combine_permuted), all f32.
    """
    B, hot, num = x.shape
    dim = params["w_emb"].shape[0]
    f32 = jnp.float32
    in_b = jnp.dtype(compute_dtype).itemsize

    # --- parameter packing (no block-diagonal / kron expansion) -------------
    w_emb_t = jnp.asarray(params["w_emb"], f32).T.astype(compute_dtype)   # (num, dim)
    w_dec_t = jnp.asarray(params["w_dec"], f32).T.astype(compute_dtype)   # (dim, num)
    wc_pln = jnp.broadcast_to(jnp.asarray(params["w_comb"], f32).reshape(hot, 1), (hot, dim))
    bc = jnp.asarray(params["b_comb"], f32).reshape(1, 1)
    wd_pln = jnp.broadcast_to(jnp.asarray(params["w_div"], f32).reshape(hot, 1), (hot, dim))
    bd_pln = jnp.broadcast_to(jnp.asarray(params["b_div"], f32).reshape(hot, 1), (hot, dim))
    bdec = jnp.asarray(params["b_dec"], f32).reshape(1, num)

    # Fold hot into the row axis; the 0/1 multi-hot input is exact in bf16.
    x2 = jnp.asarray(x).astype(compute_dtype).reshape(B * hot, num)

    # --- batch tile / VMEM planning ------------------------------------------
    lane = lambda n: -(-n // 128) * 128
    # double-buffered pipelined tile bytes per batch row (lane-padded)
    row_bytes = hot * (lane(num) * in_b + lane(num) * 4 + 2 * lane(dim) * 4) + lane(dim) * 4
    # resident weights / bias planes (also double-buffered by the pipeline)
    w_bytes = (num * lane(dim) + dim * lane(num)) * in_b \
        + 3 * max(hot, 8) * lane(dim) * 4 + lane(num) * 4 + 512

    tb_cap = max(8, (vmem_budget_bytes - 4 * w_bytes - (2 << 20)) // max(1, 2 * row_bytes))
    tb = min(block_b, B, tb_cap)
    if B >= 16:
        # Keep >= 2 grid steps so the "parallel" batch axis can shard across
        # v7x's two TensorCores; harmless one extra step on single-TC chips.
        tb = min(tb, max(8, -(-(B // 2) // 8) * 8))
    if tb < B:
        tb = max(8, (tb // 8) * 8)   # (8,128) rule on the blocked row axis
    if tb >= B:
        tb = B                       # single full block
    grid = (pl.cdiv(B, tb),)

    vmem_limit = int(min(56 << 20,
                         max(32 << 20, 2 * tb * row_bytes + 4 * w_bytes + (8 << 20))))

    tbh = tb * hot
    row_spec = lambda cols: pl.BlockSpec((tbh, cols), lambda i: (i, 0))
    const_spec = lambda shape: pl.BlockSpec(shape, lambda i: (0, 0))

    out_shape = (
        jax.ShapeDtypeStruct((B * hot, num), f32),   # x_decoder       (rows = batch*hot)
        jax.ShapeDtypeStruct((B * hot, dim), f32),   # x_embedding
        jax.ShapeDtypeStruct((B * hot, dim), f32),   # x_de_embedding
        jax.ShapeDtypeStruct((B, dim), f32),         # x_combine (squeezed)
    )

    dec_f, emb_f, de_f, comb_f = pl.pallas_call(
        _make_kernel(tb, hot, dim),
        out_shape=out_shape,
        grid_spec=pltpu.PrefetchScalarGridSpec(
            num_scalar_prefetch=0,
            grid=grid,
            in_specs=[
                row_spec(num),            # x            (tb*hot, num)
                const_spec((num, dim)),   # W_emb^T      (resident across the grid)
                const_spec((dim, num)),   # W_dec^T
                const_spec((hot, dim)),   # w_comb broadcast plane
                const_spec((1, 1)),       # b_comb
                const_spec((hot, dim)),   # w_div broadcast plane
                const_spec((hot, dim)),   # b_div broadcast plane
                const_spec((1, num)),     # b_dec row
            ],
            out_specs=[
                row_spec(num),                              # x_decoder
                row_spec(dim),                              # x_embedding
                row_spec(dim),                              # x_de_embedding
                pl.BlockSpec((tb, dim), lambda i: (i, 0)),  # x_combine
            ],
        ),
        compiler_params=pltpu.CompilerParams(
            dimension_semantics=("parallel",),
            vmem_limit_bytes=vmem_limit,
        ),
    )(x2, w_emb_t, w_dec_t, wc_pln, bc, wd_pln, bd_pln, bdec)

    # Free, contiguous reshapes back to the exact PyTorch output shapes.
    return (
        dec_f.reshape(B, hot, num),
        emb_f.reshape(B, hot, dim),
        de_f.reshape(B, hot, dim),
        comb_f.reshape(B, 1, dim),
    )


def init_params(key, embedding_num, embedding_dim, hot_num):
    """Deterministic parameter init matching the module's shapes.
    w_node_embedding is eye-initialized (as in the PyTorch __init__)."""
    k1, k2, k3, k4, k5, k6 = jax.random.split(key, 6)

    def unif(k, shape, fan_in):
        bound = 1.0 / jnp.sqrt(jnp.float32(fan_in))
        return jax.random.uniform(k, shape, jnp.float32, -bound, bound)

    return {
        # nn.Linear(embedding_num, embedding_dim, bias=False), eye init
        "w_emb": jnp.eye(embedding_dim, embedding_num, dtype=jnp.float32),
        # nn.Linear(hot_num, 1)
        "w_comb": unif(k1, (1, hot_num), hot_num),
        "b_comb": unif(k2, (1,), hot_num),
        # nn.Linear(1, hot_num)
        "w_div": unif(k3, (hot_num, 1), 1),
        "b_div": unif(k4, (hot_num,), 1),
        # nn.Linear(embedding_dim, embedding_num)
        "w_dec": unif(k5, (embedding_num, embedding_dim), embedding_dim),
        "b_dec": unif(k6, (embedding_num,), embedding_dim),
    }


def reference_forward(x, p):
    """Pure-JAX f32 reference mirroring the PyTorch forward (slope=0.1)."""
    xe = _leaky_relu(jnp.einsum("bhn,dn->bhd", x, p["w_emb"]))              # (B,hot,dim)
    x_perm = jnp.transpose(xe, (0, 2, 1))                                   # (B,dim,hot)
    x_comb = jnp.einsum("bdh,oh->bdo", x_perm, p["w_comb"]) + p["b_comb"]   # (B,dim,1)
    x_de = jnp.einsum("bdo,ho->bdh", x_comb, p["w_div"]) + p["b_div"]       # (B,dim,hot)
    x_de = _leaky_relu(jnp.transpose(x_de, (0, 2, 1)))                      # (B,hot,dim)
    x_dec = jnp.einsum("bhd,nd->bhn", x_de, p["w_dec"]) + p["b_dec"]        # (B,hot,num)
    return x_dec, xe, x_de, jnp.transpose(x_comb, (0, 2, 1))


if __name__ == "__main__":
    # Small deterministic example: B=48 with a 16-row batch tile -> 3 grid steps
    # (exercises the batch-blocked grid, the >=2-step megacore path, and the
    # hot-folded bf16 matmuls).
    B, hot_num, embedding_num, embedding_dim = 48, 8, 32, 16

    key = jax.random.PRNGKey(0)
    kx, kp = jax.random.split(key)
    # synthetic multi-hot-ish 0/1 features (exact in bf16)
    x = (jax.random.uniform(kx, (B, hot_num, embedding_num), jnp.float32) > 0.7
         ).astype(jnp.float32)
    params = init_params(kp, embedding_num, embedding_dim, hot_num)

    outs = graph_embedding2_forward(x, params, block_b=16)
    outs = jax.block_until_ready(outs)

    refs = reference_forward(x, params)
    names = ["x_decoder", "x_embedding", "x_de_embedding", "x_combine"]
    # x_decoder goes through the bf16 decoder matmul -> looser tolerance;
    # the other outputs are computed in f32 from exactly-representable inputs.
    tols = [5e-2, 1e-5, 1e-5, 1e-5]
    for name, o, r, tol in zip(names, outs, refs, tols):
        assert o.shape == r.shape, (name, o.shape, r.shape)
        assert jnp.allclose(o, r, atol=tol, rtol=tol), name

    print("KERNEL_OK")
</pallas_src>

<mosaic_0001>
module attributes {stable_mosaic.version = 11 : i64} {
  func.func @kernel(%arg0: i32, %arg1: memref<128x32xbf16, #tpu.memory_space<vmem>>, %arg2: memref<32x16xbf16, #tpu.memory_space<vmem>>, %arg3: memref<16x32xbf16, #tpu.memory_space<vmem>>, %arg4: memref<8x16xf32, #tpu.memory_space<vmem>>, %arg5: memref<1x1xf32, #tpu.memory_space<vmem>>, %arg6: memref<8x16xf32, #tpu.memory_space<vmem>>, %arg7: memref<8x16xf32, #tpu.memory_space<vmem>>, %arg8: memref<1x32xf32, #tpu.memory_space<vmem>>, %arg9: memref<128x32xf32, #tpu.memory_space<vmem>>, %arg10: memref<128x16xf32, #tpu.memory_space<vmem>>, %arg11: memref<128x16xf32, #tpu.memory_space<vmem>>, %arg12: memref<16x16xf32, #tpu.memory_space<vmem>>) attributes {dimension_semantics = [#tpu.dimension_semantics<parallel>], iteration_bounds = array<i64: 3>, scalar_prefetch = 0 : i64, scratch_operands = 0 : i64, tpu.core_type = #tpu.core_type<tc>, window_params = [{transform_indices = @transform_0, window_bounds = array<i64: 128, 32>}, {pipeline_mode = #tpu.pipeline_mode<synchronous>, transform_indices = @transform_1, window_bounds = array<i64: 32, 16>}, {pipeline_mode = #tpu.pipeline_mode<synchronous>, transform_indices = @transform_2, window_bounds = array<i64: 16, 32>}, {pipeline_mode = #tpu.pipeline_mode<synchronous>, transform_indices = @transform_3, window_bounds = array<i64: 8, 16>}, {pipeline_mode = #tpu.pipeline_mode<synchronous>, transform_indices = @transform_4, window_bounds = array<i64: 1, 1>}, {pipeline_mode = #tpu.pipeline_mode<synchronous>, transform_indices = @transform_5, window_bounds = array<i64: 8, 16>}, {pipeline_mode = #tpu.pipeline_mode<synchronous>, transform_indices = @transform_6, window_bounds = array<i64: 8, 16>}, {pipeline_mode = #tpu.pipeline_mode<synchronous>, transform_indices = @transform_7, window_bounds = array<i64: 1, 32>}, {transform_indices = @transform_8, window_bounds = array<i64: 128, 32>}, {transform_indices = @transform_9, window_bounds = array<i64: 128, 16>}, {transform_indices = @transform_10, window_bounds = array<i64: 128, 16>}, {transform_indices = @transform_11, window_bounds = array<i64: 16, 16>}]} {
    %c0 = arith.constant 0 : index
    %c0_0 = arith.constant 0 : index
    %0 = vector.load %arg1[%c0, %c0_0] : memref<128x32xbf16, #tpu.memory_space<vmem>>, vector<128x32xbf16>
    %c0_1 = arith.constant 0 : index
    %c0_2 = arith.constant 0 : index
    %1 = vector.load %arg2[%c0_1, %c0_2] : memref<32x16xbf16, #tpu.memory_space<vmem>>, vector<32x16xbf16>
    %cst = arith.constant dense<0.000000e+00> : vector<128x16xf32>
    %2 = tpu.matmul %0, %1, %cst {dimension_numbers = #tpu.dot_dimension_numbers<[1], [0], [0], [1], [0, 0, 1, 1], [], []>} : vector<128x32xbf16>, vector<32x16xbf16>, vector<128x16xf32> -> vector<128x16xf32>
    %cst_3 = arith.constant 1.000000e-01 : f32
    %3 = vector.broadcast %cst_3 : f32 to vector<128x16xf32>
    %4 = arith.mulf %3, %2 : vector<128x16xf32>
    %5 = arith.maximumf %2, %4 : vector<128x16xf32>
    %c0_4 = arith.constant 0 : index
    %c0_5 = arith.constant 0 : index
    %6 = vector.load %arg10[%c0_4, %c0_5] : memref<128x16xf32, #tpu.memory_space<vmem>>, vector<128x16xf32>
    tpu.vector_store %arg10[%c0_4, %c0_5], %5 {strides = array<i32>} : memref<128x16xf32, #tpu.memory_space<vmem>>, vector<128x16xf32>,
    %7 = vector.shape_cast %5 : vector<128x16xf32> to vector<16x8x16xf32>
    %c0_6 = arith.constant 0 : index
    %c0_7 = arith.constant 0 : index
    %8 = vector.load %arg4[%c0_6, %c0_7] : memref<8x16xf32, #tpu.memory_space<vmem>>, vector<8x16xf32>
    %9 = vector.shape_cast %8 : vector<8x16xf32> to vector<1x8x16xf32>
    %10 = vector.broadcast %9 : vector<1x8x16xf32> to vector<16x8x16xf32>
    %11 = arith.mulf %7, %10 : vector<16x8x16xf32>
    %cst_8 = arith.constant dense<0.000000e+00> : vector<16x16xf32>
    %12 = vector.multi_reduction <add>, %11, %cst_8 [1] : vector<16x8x16xf32> to vector<16x16xf32>
    %c0_9 = arith.constant 0 : index
    %c0_10 = arith.constant 0 : index
    %13 = vector.load %arg5[%c0_9, %c0_10] : memref<1x1xf32, #tpu.memory_space<vmem>>, vector<1x1xf32>
    %14 = vector.broadcast %13 : vector<1x1xf32> to vector<16x16xf32>
    %15 = arith.addf %12, %14 : vector<16x16xf32>
    %c0_11 = arith.constant 0 : index
    %c0_12 = arith.constant 0 : index
    %16 = vector.load %arg12[%c0_11, %c0_12] : memref<16x16xf32, #tpu.memory_space<vmem>>, vector<16x16xf32>
    tpu.vector_store %arg12[%c0_11, %c0_12], %15 {strides = array<i32>} : memref<16x16xf32, #tpu.memory_space<vmem>>, vector<16x16xf32>,
    %17 = vector.shape_cast %15 : vector<16x16xf32> to vector<16x1x16xf32>
    %c0_13 = arith.constant 0 : index
    %c0_14 = arith.constant 0 : index
    %18 = vector.load %arg6[%c0_13, %c0_14] : memref<8x16xf32, #tpu.memory_space<vmem>>, vector<8x16xf32>
    %19 = vector.shape_cast %18 : vector<8x16xf32> to vector<1x8x16xf32>
    %20 = vector.broadcast %17 : vector<16x1x16xf32> to vector<16x8x16xf32>
    %21 = vector.broadcast %19 : vector<1x8x16xf32> to vector<16x8x16xf32>
    %22 = arith.mulf %20, %21 : vector<16x8x16xf32>
    %c0_15 = arith.constant 0 : index
    %c0_16 = arith.constant 0 : index
    %23 = vector.load %arg7[%c0_15, %c0_16] : memref<8x16xf32, #tpu.memory_space<vmem>>, vector<8x16xf32>
    %24 = vector.shape_cast %23 : vector<8x16xf32> to vector<1x8x16xf32>
    %25 = vector.broadcast %24 : vector<1x8x16xf32> to vector<16x8x16xf32>
    %26 = arith.addf %22, %25 : vector<16x8x16xf32>
    %cst_17 = arith.constant 1.000000e-01 : f32
    %27 = vector.broadcast %cst_17 : f32 to vector<16x8x16xf32>
    %28 = arith.mulf %27, %26 : vector<16x8x16xf32>
    %29 = arith.maximumf %26, %28 : vector<16x8x16xf32>
    %30 = vector.shape_cast %29 : vector<16x8x16xf32> to vector<128x16xf32>
    %c0_18 = arith.constant 0 : index
    %c0_19 = arith.constant 0 : index
    %31 = vector.load %arg11[%c0_18, %c0_19] : memref<128x16xf32, #tpu.memory_space<vmem>>, vector<128x16xf32>
    tpu.vector_store %arg11[%c0_18, %c0_19], %30 {strides = array<i32>} : memref<128x16xf32, #tpu.memory_space<vmem>>, vector<128x16xf32>,
    %32 = arith.truncf %30 : vector<128x16xf32> to vector<128x16xbf16>
    %c0_20 = arith.constant 0 : index
    %c0_21 = arith.constant 0 : index
    %33 = vector.load %arg3[%c0_20, %c0_21] : memref<16x32xbf16, #tpu.memory_space<vmem>>, vector<16x32xbf16>
    %cst_22 = arith.constant dense<0.000000e+00> : vector<128x32xf32>
    %34 = tpu.matmul %32, %33, %cst_22 {dimension_numbers = #tpu.dot_dimension_numbers<[1], [0], [0], [1], [0, 0, 1, 1], [], []>} : vector<128x16xbf16>, vector<16x32xbf16>, vector<128x32xf32> -> vector<128x32xf32>
    %c0_23 = arith.constant 0 : index
    %c0_24 = arith.constant 0 : index
    %35 = vector.load %arg8[%c0_23, %c0_24] : memref<1x32xf32, #tpu.memory_space<vmem>>, vector<1x32xf32>
    %36 = vector.broadcast %35 : vector<1x32xf32> to vector<128x32xf32>
    %37 = arith.addf %34, %36 : vector<128x32xf32>
    %c0_25 = arith.constant 0 : index
    %c0_26 = arith.constant 0 : index
    %38 = vector.load %arg9[%c0_25, %c0_26] : memref<128x32xf32, #tpu.memory_space<vmem>>, vector<128x32xf32>
    tpu.vector_store %arg9[%c0_25, %c0_26], %37 {strides = array<i32>} : memref<128x32xf32, #tpu.memory_space<vmem>>, vector<128x32xf32>,
    return
  }
  func.func @transform_0(%arg0: i32) -> (i32, i32) {
    %c0_i32 = arith.constant 0 : i32
    %c0_i32_0 = arith.constant 0 : i32
    return %arg0, %c0_i32 : i32, i32
  }
  func.func @transform_1(%arg0: i32) -> (i32, i32) {
    %c0_i32 = arith.constant 0 : i32
    %c0_i32_0 = arith.constant 0 : i32
    %c0_i32_1 = arith.constant 0 : i32
    return %c0_i32, %c0_i32_0 : i32, i32
  }
  func.func @transform_2(%arg0: i32) -> (i32, i32) {
    %c0_i32 = arith.constant 0 : i32
    %c0_i32_0 = arith.constant 0 : i32
    %c0_i32_1 = arith.constant 0 : i32
    return %c0_i32, %c0_i32_0 : i32, i32
  }
  func.func @transform_3(%arg0: i32) -> (i32, i32) {
    %c0_i32 = arith.constant 0 : i32
    %c0_i32_0 = arith.constant 0 : i32
    %c0_i32_1 = arith.constant 0 : i32
    return %c0_i32, %c0_i32_0 : i32, i32
  }
  func.func @transform_4(%arg0: i32) -> (i32, i32) {
    %c0_i32 = arith.constant 0 : i32
    %c0_i32_0 = arith.constant 0 : i32
    %c0_i32_1 = arith.constant 0 : i32
    return %c0_i32, %c0_i32_0 : i32, i32
  }
  func.func @transform_5(%arg0: i32) -> (i32, i32) {
    %c0_i32 = arith.constant 0 : i32
    %c0_i32_0 = arith.constant 0 : i32
    %c0_i32_1 = arith.constant 0 : i32
    return %c0_i32, %c0_i32_0 : i32, i32
  }
  func.func @transform_6(%arg0: i32) -> (i32, i32) {
    %c0_i32 = arith.constant 0 : i32
    %c0_i32_0 = arith.constant 0 : i32
    %c0_i32_1 = arith.constant 0 : i32
    return %c0_i32, %c0_i32_0 : i32, i32
  }
  func.func @transform_7(%arg0: i32) -> (i32, i32) {
    %c0_i32 = arith.constant 0 : i32
    %c0_i32_0 = arith.constant 0 : i32
    %c0_i32_1 = arith.constant 0 : i32
    return %c0_i32, %c0_i32_0 : i32, i32
  }
  func.func @transform_8(%arg0: i32) -> (i32, i32) {
    %c0_i32 = arith.constant 0 : i32
    %c0_i32_0 = arith.constant 0 : i32
    return %arg0, %c0_i32 : i32, i32
  }
  func.func @transform_9(%arg0: i32) -> (i32, i32) {
    %c0_i32 = arith.constant 0 : i32
    %c0_i32_0 = arith.constant 0 : i32
    return %arg0, %c0_i32 : i32, i32
  }
  func.func @transform_10(%arg0: i32) -> (i32, i32) {
    %c0_i32 = arith.constant 0 : i32
    %c0_i32_0 = arith.constant 0 : i32
    return %arg0, %c0_i32 : i32, i32
  }
  func.func @transform_11(%arg0: i32) -> (i32, i32) {
    %c0_i32 = arith.constant 0 : i32
    %c0_i32_0 = arith.constant 0 : i32
    return %arg0, %c0_i32 : i32, i32
  }
}

</mosaic_0001>

<llo_original>
// kernel: tpu_custom_call.1
$region0: #{tpu_custom_call.1}
  #allocation0 [shape = 'u32[]', space=smem, size = 0x4, offset = 0x4, fixed_abs, tag = 'smem constant byte address 0x4 - core index']
  #allocation1 [shape = 'u32[144,128]{1,0:T(1,128)}', space=vmem, size = 0x12000, scoped, tag = 'internal scratch']
  #allocation2 [shape = 'f32[1,1]{1,0:T(1,128)S(1)}', space=vmem, size = 0x200, scoped, tag = 'scoped memory for tpu_custom_call.1']
  %s0 = inlined_call_operand.vmem [shape: bf16[384,32], index: 0, kind: input, shape index: {}]
  %s1 = inlined_call_operand.vmem [shape: bf16[32,16], index: 1, kind: input, shape index: {}]
  %s2 = inlined_call_operand.vmem [shape: bf16[16,32], index: 2, kind: input, shape index: {}]
  %s3 = inlined_call_operand.vmem [shape: f32[8,16], index: 3, kind: input, shape index: {}]
  %s4 = inlined_call_operand.<no memory space> [shape: f32[1,1], index: 4, kind: input, shape index: {}]
  %s5 = inlined_call_operand.vmem [shape: f32[8,16], index: 5, kind: input, shape index: {}]
  %s6 = inlined_call_operand.vmem [shape: f32[8,16], index: 6, kind: input, shape index: {}]
  %s7 = inlined_call_operand.vmem [shape: f32[1,32], index: 7, kind: input, shape index: {}]
  %s8 = inlined_call_operand.vmem [shape: f32[384,32], index: 8, kind: output, shape index: {0}]
  %s9 = inlined_call_operand.vmem [shape: f32[384,16], index: 9, kind: output, shape index: {1}]
  %s10 = inlined_call_operand.vmem [shape: f32[384,16], index: 10, kind: output, shape index: {2}]
  %s11 = inlined_call_operand.vmem [shape: f32[48,16], index: 11, kind: output, shape index: {3}]
  %12 = xla_tuple %s8, %s9, %s10, %s11
  %s13 = sld [smem:[#allocation0]]
  $region89: #{tpu_custom_call.1} parent=0
    _
  %s15 = ssub.s32 1, %s13
  %s16 = scalar_select 0, %s15, %s13
  %v17 = vstv %s4
  %18 = vst [vmem:[#allocation2] sm:$0x1] %v17
  loop: start=0, step=1, limit=5
  $region2: #{tpu_custom_call.1} parent=0 // loop_pre_header
    _
  $region3: #{tpu_custom_call.1} parent=0 // loop_header
    %s20 = sphi 0, %s24
    %p21 = scmp.ge.s32.totalorder %s20, 5
    %s30 = sphi 0, %s32
    %s33 = sphi 0, %s30
    %s34 = sphi 0, %s33
    %s50 = sphi 0, %s34
    %s54 = sphi 0, %s54
    %s56 = sphi 0, %s54
    %s57 = sphi 0, %s56
    %s71 = sphi 0, %s57
    %s75 = sphi 0, %s75
    %s77 = sphi 0, %s75
    %s78 = sphi 0, %s77
    %s92 = sphi 0, %s78
    %s96 = sphi 0, %s96
    %s98 = sphi 0, %s96
    %s99 = sphi 0, %s98
    %s113 = sphi 0, %s99
    %s117 = sphi 0, %s117
    %s119 = sphi 0, %s117
    %s120 = sphi 0, %s119
    %s134 = sphi 0, %s120
    %s138 = sphi 0, %s138
    %s140 = sphi 0, %s138
    %s141 = sphi 0, %s140
    %s155 = sphi 0, %s141
    %s159 = sphi 0, %s159
    %s161 = sphi 0, %s159
    %s162 = sphi 0, %s161
    %s176 = sphi 0, %s162
    %s180 = sphi 0, %s180
    %s182 = sphi 0, %s180
    %s183 = sphi 0, %s182
    %s197 = sphi 0, %s183
    %s203 = sphi 0, %s205
    %s206 = sphi 0, %s203
    %s207 = sphi 0, %s206
    %s223 = sphi 0, %s207
    %s229 = sphi 0, %s231
    %s232 = sphi 0, %s229
    %s233 = sphi 0, %s232
    %s249 = sphi 0, %s233
    %s255 = sphi 0, %s257
    %s258 = sphi 0, %s255
    %s259 = sphi 0, %s258
    %s275 = sphi 0, %s259
    %s281 = sphi 0, %s283
    %s284 = sphi 0, %s281
    %s285 = sphi 0, %s284
    %s301 = sphi 0, %s285
  $region4: #{tpu_custom_call.1} parent=0 // loop_header_branch
    %23 = sbr.rel (%p21) target = $region8
  $region5: #{tpu_custom_call.1} parent=0 // loop_body
    %s25 = ssub.s32 %s20, 1
    %s26 = ssub.s32 %s20, 2
    %s27 = sadd.s32 %s20, 1
    %s28 = ssub.s32 %s20, %s27
    %p29 = scmp.eq.s32.totalorder %s28, 0
    %s31 = sadd.s32 %s30, 1
    %s32 = scalar_select %p29, %s30, %s31
    %p35 = pneg %p29
    %p36 = scmp.eq.s32.totalorder %s20, 2
    %p37 = por %p35, %p36
    %p38 = scmp.ne.s32.totalorder %s30, %s33
    %p39 = scmp.eq.s32.totalorder %s20, 0
    %p40 = por %p38, %p39
    %p41 = scmp.ne.s32.totalorder %s30, %s33
    %p42 = scmp.eq.s32.totalorder %s25, 2
    %p43 = por %p41, %p42
    %p44 = scmp.ne.s32.totalorder %s33, %s34
    %p45 = scmp.eq.s32.totalorder %s25, 0
    %p46 = por %p44, %p45
    %p47 = scmp.ne.s32.totalorder %s33, %s34
    %p48 = scmp.eq.s32.totalorder %s26, 2
    %p49 = por %p47, %p48
    %p51 = scmp.ne.s32.totalorder %s34, %s50
    %p52 = scmp.eq.s32.totalorder %s26, 0
    %p53 = por %p51, %p52
    %s55 = sadd.s32 %s54, 1
    %p58 = scmp.eq.s32.totalorder %s20, 2
    %p59 = scmp.ne.s32.totalorder %s54, %s56
    %p60 = scmp.eq.s32.totalorder %s20, 0
    %p61 = por %p59, %p60
    %p62 = scmp.ne.s32.totalorder %s54, %s56
    %p63 = scmp.eq.s32.totalorder %s25, 2
    %p64 = por %p62, %p63
    %p65 = scmp.ne.s32.totalorder %s56, %s57
    %p66 = scmp.eq.s32.totalorder %s25, 0
    %p67 = por %p65, %p66
    %p68 = scmp.ne.s32.totalorder %s56, %s57
    %p69 = scmp.eq.s32.totalorder %s26, 2
    %p70 = por %p68, %p69
    %p72 = scmp.ne.s32.totalorder %s57, %s71
    %p73 = scmp.eq.s32.totalorder %s26, 0
    %p74 = por %p72, %p73
    %s76 = sadd.s32 %s75, 1
    %p79 = scmp.eq.s32.totalorder %s20, 2
    %p80 = scmp.ne.s32.totalorder %s75, %s77
    %p81 = scmp.eq.s32.totalorder %s20, 0
    %p82 = por %p80, %p81
    %p83 = scmp.ne.s32.totalorder %s75, %s77
    %p84 = scmp.eq.s32.totalorder %s25, 2
    %p85 = por %p83, %p84
    %p86 = scmp.ne.s32.totalorder %s77, %s78
    %p87 = scmp.eq.s32.totalorder %s25, 0
    %p88 = por %p86, %p87
    %p89 = scmp.ne.s32.totalorder %s77, %s78
    %p90 = scmp.eq.s32.totalorder %s26, 2
    %p91 = por %p89, %p90
    %p93 = scmp.ne.s32.totalorder %s78, %s92
    %p94 = scmp.eq.s32.totalorder %s26, 0
    %p95 = por %p93, %p94
    %s97 = sadd.s32 %s96, 1
    %p100 = scmp.eq.s32.totalorder %s20, 2
    %p101 = scmp.ne.s32.totalorder %s96, %s98
    %p102 = scmp.eq.s32.totalorder %s20, 0
    %p103 = por %p101, %p102
    %p104 = scmp.ne.s32.totalorder %s96, %s98
    %p105 = scmp.eq.s32.totalorder %s25, 2
    %p106 = por %p104, %p105
    %p107 = scmp.ne.s32.totalorder %s98, %s99
    %p108 = scmp.eq.s32.totalorder %s25, 0
    %p109 = por %p107, %p108
    %p110 = scmp.ne.s32.totalorder %s98, %s99
    %p111 = scmp.eq.s32.totalorder %s26, 2
    %p112 = por %p110, %p111
    %p114 = scmp.ne.s32.totalorder %s99, %s113
    %p115 = scmp.eq.s32.totalorder %s26, 0
    %p116 = por %p114, %p115
    %s118 = sadd.s32 %s117, 1
    %p121 = scmp.eq.s32.totalorder %s20, 2
    %p122 = scmp.ne.s32.totalorder %s117, %s119
    %p123 = scmp.eq.s32.totalorder %s20, 0
    %p124 = por %p122, %p123
    %p125 = scmp.ne.s32.totalorder %s117, %s119
    %p126 = scmp.eq.s32.totalorder %s25, 2
    %p127 = por %p125, %p126
    %p128 = scmp.ne.s32.totalorder %s119, %s120
    %p129 = scmp.eq.s32.totalorder %s25, 0
    %p130 = por %p128, %p129
    %p131 = scmp.ne.s32.totalorder %s119, %s120
    %p132 = scmp.eq.s32.totalorder %s26, 2
    %p133 = por %p131, %p132
    %p135 = scmp.ne.s32.totalorder %s120, %s134
    %p136 = scmp.eq.s32.totalorder %s26, 0
    %p137 = por %p135, %p136
    %s139 = sadd.s32 %s138, 1
    %p142 = scmp.eq.s32.totalorder %s20, 2
    %p143 = scmp.ne.s32.totalorder %s138, %s140
    %p144 = scmp.eq.s32.totalorder %s20, 0
    %p145 = por %p143, %p144
    %p146 = scmp.ne.s32.totalorder %s138, %s140
    %p147 = scmp.eq.s32.totalorder %s25, 2
    %p148 = por %p146, %p147
    %p149 = scmp.ne.s32.totalorder %s140, %s141
    %p150 = scmp.eq.s32.totalorder %s25, 0
    %p151 = por %p149, %p150
    %p152 = scmp.ne.s32.totalorder %s140, %s141
    %p153 = scmp.eq.s32.totalorder %s26, 2
    %p154 = por %p152, %p153
    %p156 = scmp.ne.s32.totalorder %s141, %s155
    %p157 = scmp.eq.s32.totalorder %s26, 0
    %p158 = por %p156, %p157
    %s160 = sadd.s32 %s159, 1
    %p163 = scmp.eq.s32.totalorder %s20, 2
    %p164 = scmp.ne.s32.totalorder %s159, %s161
    %p165 = scmp.eq.s32.totalorder %s20, 0
    %p166 = por %p164, %p165
    %p167 = scmp.ne.s32.totalorder %s159, %s161
    %p168 = scmp.eq.s32.totalorder %s25, 2
    %p169 = por %p167, %p168
    %p170 = scmp.ne.s32.totalorder %s161, %s162
    %p171 = scmp.eq.s32.totalorder %s25, 0
    %p172 = por %p170, %p171
    %p173 = scmp.ne.s32.totalorder %s161, %s162
    %p174 = scmp.eq.s32.totalorder %s26, 2
    %p175 = por %p173, %p174
    %p177 = scmp.ne.s32.totalorder %s162, %s176
    %p178 = scmp.eq.s32.totalorder %s26, 0
    %p179 = por %p177, %p178
    %s181 = sadd.s32 %s180, 1
    %p184 = scmp.eq.s32.totalorder %s20, 2
    %p185 = scmp.ne.s32.totalorder %s180, %s182
    %p186 = scmp.eq.s32.totalorder %s20, 0
    %p187 = por %p185, %p186
    %p188 = scmp.ne.s32.totalorder %s180, %s182
    %p189 = scmp.eq.s32.totalorder %s25, 2
    %p190 = por %p188, %p189
    %p191 = scmp.ne.s32.totalorder %s182, %s183
    %p192 = scmp.eq.s32.totalorder %s25, 0
    %p193 = por %p191, %p192
    %p194 = scmp.ne.s32.totalorder %s182, %s183
    %p195 = scmp.eq.s32.totalorder %s26, 2
    %p196 = por %p194, %p195
    %p198 = scmp.ne.s32.totalorder %s183, %s197
    %p199 = scmp.eq.s32.totalorder %s26, 0
    %p200 = por %p198, %p199
    %s201 = ssub.s32 %s20, %s27
    %p202 = scmp.eq.s32.totalorder %s201, 0
    %s204 = sadd.s32 %s203, 1
    %s205 = scalar_select %p202, %s203, %s204
    %p208 = pneg %p202
    %p209 = scmp.eq.s32.totalorder %s20, 2
    %p210 = por %p208, %p209
    %p211 = scmp.ne.s32.totalorder %s203, %s206
    %p212 = scmp.eq.s32.totalorder %s20, 0
    %p213 = por %p211, %p212
    %p214 = scmp.ne.s32.totalorder %s203, %s206
    %p215 = scmp.eq.s32.totalorder %s25, 2
    %p216 = por %p214, %p215
    %p217 = scmp.ne.s32.totalorder %s206, %s207
    %p218 = scmp.eq.s32.totalorder %s25, 0
    %p219 = por %p217, %p218
    %p220 = scmp.ne.s32.totalorder %s206, %s207
    %p221 = scmp.eq.s32.totalorder %s26, 2
    %p222 = por %p220, %p221
    %p224 = scmp.ne.s32.totalorder %s207, %s223
    %p225 = scmp.eq.s32.totalorder %s26, 0
    %p226 = por %p224, %p225
    %s227 = ssub.s32 %s20, %s27
    %p228 = scmp.eq.s32.totalorder %s227, 0
    %s230 = sadd.s32 %s229, 1
    %s231 = scalar_select %p228, %s229, %s230
    %p234 = pneg %p228
    %p235 = scmp.eq.s32.totalorder %s20, 2
    %p236 = por %p234, %p235
    %p237 = scmp.ne.s32.totalorder %s229, %s232
    %p238 = scmp.eq.s32.totalorder %s20, 0
    %p239 = por %p237, %p238
    %p240 = scmp.ne.s32.totalorder %s229, %s232
    %p241 = scmp.eq.s32.totalorder %s25, 2
    %p242 = por %p240, %p241
    %p243 = scmp.ne.s32.totalorder %s232, %s233
    %p244 = scmp.eq.s32.totalorder %s25, 0
    %p245 = por %p243, %p244
    %p246 = scmp.ne.s32.totalorder %s232, %s233
    %p247 = scmp.eq.s32.totalorder %s26, 2
    %p248 = por %p246, %p247
    %p250 = scmp.ne.s32.totalorder %s233, %s249
    %p251 = scmp.eq.s32.totalorder %s26, 0
    %p252 = por %p250, %p251
    %s253 = ssub.s32 %s20, %s27
    %p254 = scmp.eq.s32.totalorder %s253, 0
    %s256 = sadd.s32 %s255, 1
    %s257 = scalar_select %p254, %s255, %s256
    %p260 = pneg %p254
    %p261 = scmp.eq.s32.totalorder %s20, 2
    %p262 = por %p260, %p261
    %p263 = scmp.ne.s32.totalorder %s255, %s258
    %p264 = scmp.eq.s32.totalorder %s20, 0
    %p265 = por %p263, %p264
    %p266 = scmp.ne.s32.totalorder %s255, %s258
    %p267 = scmp.eq.s32.totalorder %s25, 2
    %p268 = por %p266, %p267
    %p269 = scmp.ne.s32.totalorder %s258, %s259
    %p270 = scmp.eq.s32.totalorder %s25, 0
    %p271 = por %p269, %p270
    %p272 = scmp.ne.s32.totalorder %s258, %s259
    %p273 = scmp.eq.s32.totalorder %s26, 2
    %p274 = por %p272, %p273
    %p276 = scmp.ne.s32.totalorder %s259, %s275
    %p277 = scmp.eq.s32.totalorder %s26, 0
    %p278 = por %p276, %p277
    %s279 = ssub.s32 %s20, %s27
    %p280 = scmp.eq.s32.totalorder %s279, 0
    %s282 = sadd.s32 %s281, 1
    %s283 = scalar_select %p280, %s281, %s282
    %p286 = pneg %p280
    %p287 = scmp.eq.s32.totalorder %s20, 2
    %p288 = por %p286, %p287
    %p289 = scmp.ne.s32.totalorder %s281, %s284
    %p290 = scmp.eq.s32.totalorder %s20, 0
    %p291 = por %p289, %p290
    %p292 = scmp.ne.s32.totalorder %s281, %s284
    %p293 = scmp.eq.s32.totalorder %s25, 2
    %p294 = por %p292, %p293
    %p295 = scmp.ne.s32.totalorder %s284, %s285
    %p296 = scmp.eq.s32.totalorder %s25, 0
    %p297 = por %p295, %p296
    %p298 = scmp.ne.s32.totalorder %s284, %s285
    %p299 = scmp.eq.s32.totalorder %s26, 2
    %p300 = por %p298, %p299
    %p302 = scmp.ne.s32.totalorder %s285, %s301
    %p303 = scmp.eq.s32.totalorder %s26, 0
    %p304 = por %p302, %p303
    %p305 = scmp.le.s32.totalorder 1, %s20
    %p306 = scmp.lt.s32.totalorder %s20, 4
    %p307 = pnand %p305, %p306
    %p308 = pneg %p307
    // Predicated region
    $region9: #{tpu_custom_call.1} parent=5 // pred_check
      _
    $region10: #{tpu_custom_call.1} parent=5 // pred_check_branch
      %310 = sbr.rel (%p307) target = $region12
    $region11: #{tpu_custom_call.1} parent=5 // pred_region
      %s311 = ssub.s32 %s20, 1
      // Predicated region
      $region13: #{tpu_custom_call.1} parent=11 // pred_check
        %p312 = pneg %p67
      $region14: #{tpu_custom_call.1} parent=11 // pred_check_branch
        %314 = sbr.rel (%p312) target = $region16
      $region15: #{tpu_custom_call.1} parent=11 // pred_region
        _
      $region16: #{tpu_custom_call.1} parent=11 // pred_fallthru
        _
      // Predicated region
      $region17: #{tpu_custom_call.1} parent=11 // pred_check
        %p315 = pneg %p88
      $region18: #{tpu_custom_call.1} parent=11 // pred_check_branch
        %317 = sbr.rel (%p315) target = $region20
      $region19: #{tpu_custom_call.1} parent=11 // pred_region
        _
      $region20: #{tpu_custom_call.1} parent=11 // pred_fallthru
        _
      // Predicated region
      $region21: #{tpu_custom_call.1} parent=11 // pred_check
        %p318 = pneg %p109
      $region22: #{tpu_custom_call.1} parent=11 // pred_check_branch
        %320 = sbr.rel (%p318) target = $region24
      $region23: #{tpu_custom_call.1} parent=11 // pred_region
        _
      $region24: #{tpu_custom_call.1} parent=11 // pred_fallthru
        _
      // Predicated region
      $region25: #{tpu_custom_call.1} parent=11 // pred_check
        %p321 = pneg %p130
      $region26: #{tpu_custom_call.1} parent=11 // pred_check_branch
        %323 = sbr.rel (%p321) target = $region28
      $region27: #{tpu_custom_call.1} parent=11 // pred_region
        _
      $region28: #{tpu_custom_call.1} parent=11 // pred_fallthru
        _
      // Predicated region
      $region29: #{tpu_custom_call.1} parent=11 // pred_check
        %p324 = pneg %p151
      $region30: #{tpu_custom_call.1} parent=11 // pred_check_branch
        %326 = sbr.rel (%p324) target = $region32
      $region31: #{tpu_custom_call.1} parent=11 // pred_region
        _
      $region32: #{tpu_custom_call.1} parent=11 // pred_fallthru
        _
      // Predicated region
      $region33: #{tpu_custom_call.1} parent=11 // pred_check
        %p327 = pneg %p172
      $region34: #{tpu_custom_call.1} parent=11 // pred_check_branch
        %329 = sbr.rel (%p327) target = $region36
      $region35: #{tpu_custom_call.1} parent=11 // pred_region
        _
      $region36: #{tpu_custom_call.1} parent=11 // pred_fallthru
        _
      // Predicated region
      $region37: #{tpu_custom_call.1} parent=11 // pred_check
        %p330 = pneg %p193
      $region38: #{tpu_custom_call.1} parent=11 // pred_check_branch
        %332 = sbr.rel (%p330) target = $region40
      $region39: #{tpu_custom_call.1} parent=11 // pred_region
        _
      $region40: #{tpu_custom_call.1} parent=11 // pred_fallthru
        _
    $region12: #{tpu_custom_call.1} parent=5 // pred_fallthru
      _
    %p333 = scmp.lt.s32.totalorder %s20, 3
    // Predicated region
    $region41: #{tpu_custom_call.1} parent=5 // pred_check
      %p334 = pneg %p333
    $region42: #{tpu_custom_call.1} parent=5 // pred_check_branch
      %336 = sbr.rel (%p334) target = $region44
    $region43: #{tpu_custom_call.1} parent=5 // pred_region
      // Predicated region
      $region45: #{tpu_custom_call.1} parent=43 // pred_check
        %p337 = pneg %p40
      $region46: #{tpu_custom_call.1} parent=43 // pred_check_branch
        %339 = sbr.rel (%p337) target = $region48
      $region47: #{tpu_custom_call.1} parent=43 // pred_region
        %s340 = smul.u32 16, %s20
        %p341 = scmp.lt.s32.totalorder %s340, 47
        %s342 = scalar_select %p341, %s340, 47
        %s343 = smul.addr %s342, 4
        %s344 = scalar_lea.vmem %s0, %s343
        %s345 = smul.u32 16, %s20
      $region48: #{tpu_custom_call.1} parent=43 // pred_fallthru
        _
    $region44: #{tpu_custom_call.1} parent=5 // pred_fallthru
      _
    %p346 = scmp.le.s32.totalorder 1, %s20
    %p347 = scmp.lt.s32.totalorder %s20, 4
    %p348 = pnand %p346, %p347
    %p349 = pneg %p348
    // Predicated region
    $region49: #{tpu_custom_call.1} parent=5 // pred_check
      _
    $region50: #{tpu_custom_call.1} parent=5 // pred_check_branch
      %351 = sbr.rel (%p348) target = $region52
    $region51: #{tpu_custom_call.1} parent=5 // pred_region
      %s352 = ssub.s32 %s20, 1
      %s353 = smul.u32 16, %s25
      %p354 = scmp.lt.s32.totalorder %s353, 47
      %s355 = scalar_select %p354, %s353, 47
      %s356 = smul.addr %s355, 4
      %s357 = scalar_lea.vmem %s0, %s356
      %p358 = pneg %p46
      %p359 = pneg %p43
      %p360 = pneg %p67
      %p361 = pneg %p64
      %p362 = pneg %p88
      %p363 = pneg %p85
      %p364 = pneg %p109
      %p365 = pneg %p106
      %p366 = pneg %p130
      %p367 = pneg %p127
      %p368 = pneg %p151
      %p369 = pneg %p148
      %p370 = pneg %p172
      %p371 = pneg %p169
      %p372 = pneg %p193
      %p373 = pneg %p190
      %p374 = pneg %p219
      %p375 = pneg %p216
      %s376 = smul.u32 16, %s25
      %p377 = scmp.lt.s32.totalorder %s376, 47
      %s378 = scalar_select %p377, %s376, 47
      %s379 = smul.addr %s378, 8
      %s380 = scalar_lea.vmem %s8, %s379
      %p381 = pneg %p245
      %p382 = pneg %p242
      %s383 = smul.u32 16, %s25
      %p384 = scmp.lt.s32.totalorder %s383, 47
      %s385 = scalar_select %p384, %s383, 47
      %s386 = smul.addr %s385, 8
      %s387 = scalar_lea.vmem %s9, %s386
      %p388 = pneg %p271
      %p389 = pneg %p268
      %s390 = smul.u32 16, %s25
      %p391 = scmp.lt.s32.totalorder %s390, 47
      %s392 = scalar_select %p391, %s390, 47
      %s393 = smul.addr %s392, 8
      %s394 = scalar_lea.vmem %s10, %s393
      %p395 = pneg %p297
      %p396 = pneg %p294
      %s397 = smul.u32 2, %s25
      %p398 = scmp.lt.s32.totalorder %s397, 5
      %s399 = scalar_select %p398, %s397, 5
      %s400 = smul.addr %s399, 8
      %s401 = scalar_lea.vmem %s11, %s400
      %s402 = smul.u32 16, %s25
      %p403 = scmp.lt.s32.totalorder %s402, 47
      %s404 = scalar_select %p403, %s402, 47
      %s405 = smul.addr %s404, 4
      %s406 = scalar_lea.vmem %s0, %s405
      %s407 = smul.u32 16, %s25
      %s408 = smul.u32 16, %s25
      %p409 = scmp.lt.s32.totalorder %s408, 47
      %s410 = scalar_select %p409, %s408, 47
      %s411 = smul.addr %s410, 8
      %s412 = scalar_lea.vmem %s8, %s411
      %s413 = smul.u32 16, %s25
      %s414 = smul.u32 16, %s25
      %p415 = scmp.lt.s32.totalorder %s414, 47
      %s416 = scalar_select %p415, %s414, 47
      %s417 = smul.addr %s416, 8
      %s418 = scalar_lea.vmem %s9, %s417
      %s419 = smul.u32 16, %s25
      %s420 = smul.u32 16, %s25
      %p421 = scmp.lt.s32.totalorder %s420, 47
      %s422 = scalar_select %p421, %s420, 47
      %s423 = smul.addr %s422, 8
      %s424 = scalar_lea.vmem %s10, %s423
      %s425 = smul.u32 16, %s25
      %s426 = smul.u32 2, %s25
      %p427 = scmp.lt.s32.totalorder %s426, 5
      %s428 = scalar_select %p427, %s426, 5
      %s429 = smul.addr %s428, 8
      %s430 = scalar_lea.vmem %s11, %s429
      %s431 = smul.u32 2, %s25
      %v433 = vld [vmem:[%s406] sm:$0xf]
      %v434 = vld [vmem:[%s406 + $0x4] sm:$0xf]
      %v435 = vld [vmem:[%s406 + $0x8] sm:$0xf]
      %v436 = vld [vmem:[%s406 + $0xc] sm:$0xf]
      %v437 = vld [vmem:[%s406 + $0x10] sm:$0xf]
      %v438 = vld [vmem:[%s406 + $0x14] sm:$0xf]
      %v439 = vld [vmem:[%s406 + $0x18] sm:$0xf]
      %v440 = vld [vmem:[%s406 + $0x1c] sm:$0xf]
      %v441 = vld [vmem:[%s406 + $0x20] sm:$0xf]
      %v442 = vld [vmem:[%s406 + $0x24] sm:$0xf]
      %v443 = vld [vmem:[%s406 + $0x28] sm:$0xf]
      %v444 = vld [vmem:[%s406 + $0x2c] sm:$0xf]
      %v445 = vld [vmem:[%s406 + $0x30] sm:$0xf]
      %v446 = vld [vmem:[%s406 + $0x34] sm:$0xf]
      %v447 = vld [vmem:[%s406 + $0x38] sm:$0xf]
      %v448 = vld [vmem:[%s406 + $0x3c] sm:$0xf]
      %v449 = vld [vmem:[%s1] sm:$0xf]
      %v450 = vld [vmem:[%s1 + $0x4] sm:$0xf]
      %v451 = vld [vmem:[%s1 + $0x8] sm:$0xf]
      %v452 = vld [vmem:[%s1 + $0xc] sm:$0xf]
      %v469 = vunpack.c.l.b16 %v433
      %v470 = vunpack.c.l.b16 %v434
      %v471 = vunpack.c.l.b16 %v435
      %v472 = vunpack.c.l.b16 %v436
      %v473 = vunpack.c.l.b16 %v437
      %v474 = vunpack.c.l.b16 %v438
      %v475 = vunpack.c.l.b16 %v439
      %v476 = vunpack.c.l.b16 %v440
      %v477 = vunpack.c.l.b16 %v441
      %v478 = vunpack.c.l.b16 %v442
      %v479 = vunpack.c.l.b16 %v443
      %v480 = vunpack.c.l.b16 %v444
      %v481 = vunpack.c.l.b16 %v445
      %v482 = vunpack.c.l.b16 %v446
      %v483 = vunpack.c.l.b16 %v447
      %v484 = vunpack.c.l.b16 %v448
      %v485 = vpack.c.b16 %v470, %v469
      %v486 = vpack.c.b16 %v472, %v471
      %v487 = vpack.c.b16 %v474, %v473
      %v488 = vpack.c.b16 %v476, %v475
      %v489 = vpack.c.b16 %v478, %v477
      %v490 = vpack.c.b16 %v480, %v479
      %v491 = vpack.c.b16 %v482, %v481
      %v492 = vpack.c.b16 %v484, %v483
      %v497 = vunpack.c.l.b16 %v449
      %v498 = vunpack.c.l.b16 %v450
      %v499 = vunpack.c.l.b16 %v451
      %v500 = vunpack.c.l.b16 %v452
      %v501 = vpack.c.b16 %v498, %v497
      %v502 = vpack.c.b16 %v500, %v499
      %vm505 = vcmask 261120
      %v507 = vsel %vm505, %v485, 0
      %v510 = vsel %vm505, %v486, 0
      %v513 = vsel %vm505, %v487, 0
      %v516 = vsel %vm505, %v488, 0
      %v519 = vsel %vm505, %v489, 0
      %v522 = vsel %vm505, %v490, 0
      %v525 = vsel %vm505, %v491, 0
      %v528 = vsel %vm505, %v492, 0
      %530 = vmatprep.subr.bf16.mxu0 0
      %531 = vmatpush1.bf16.msra.mxu0 %v501
      %532 = vmatprep.subr.bf16.mxu0 0
      %533 = vmatpush1.bf16.msra.mxu0 %v502
      %534 = vmatprep.subr.bf16.mxu0 0
      %535 = vmatpush1.bf16.msra.mxu0 0
      %536 = vmatprep.subr.bf16.mxu0 0
      %537 = vmatpush1.bf16.msra.mxu0 0
      %538 = vmatprep.subr.bf16.mxu0 0
      %539 = vmatpush1.bf16.msra.mxu0 0
      %540 = vmatprep.subr.bf16.mxu0 0
      %541 = vmatpush1.bf16.msra.mxu0 0
      %542 = vmatprep.subr.bf16.mxu0 0
      %543 = vmatpush1.bf16.msra.mxu0 0
      %544 = vmatprep.subr.bf16.mxu0 0
      %545 = vmatpush1.bf16.msra.mxu0 0
      %546 = vmatprep.subr.bf16.mxu0 0
      %547 = vmatpush1.bf16.msra.mxu0 0
      %548 = vmatprep.subr.bf16.mxu0 0
      %549 = vmatpush1.bf16.msra.mxu0 0
      %550 = vmatprep.subr.bf16.mxu0 0
      %551 = vmatpush1.bf16.msra.mxu0 0
      %552 = vmatprep.subr.bf16.mxu0 0
      %553 = vmatpush1.bf16.msra.mxu0 0
      %554 = vmatprep.subr.bf16.mxu0 0
      %555 = vmatpush1.bf16.msra.mxu0 0
      %556 = vmatprep.subr.bf16.mxu0 0
      %557 = vmatpush1.bf16.msra.mxu0 0
      %558 = vmatprep.subr.bf16.mxu0 0
      %559 = vmatpush1.bf16.msra.mxu0 0
      %560 = vmatprep.subr.bf16.mxu0 0
      %561 = vmatpush1.bf16.msra.mxu0 0
      %562 = vmatprep.mubr.bf16.mxu0 0
      %563 = vmatmul.mubr.bf16.gmra.mrb[0].mxu0 %v507
      %v564 = vpop.f32.mrb[0].mxu0
      %v565 = vadd.f32 0.0, %v564
      %v566 = vpop.f32.mrb[0].mxu0
      %v567 = vpop.f32.mrb[0].mxu0
      %v568 = vadd.f32 0.0, %v567
      %v569 = vpop.f32.mrb[0].mxu0
      %570 = vmatprep.mubr.bf16.mxu0 0
      %571 = vmatmul.mubr.bf16.gmra.mrb[0].mxu0 %v510
      %v572 = vpop.f32.mrb[0].mxu0
      %v573 = vadd.f32 0.0, %v572
      %v574 = vpop.f32.mrb[0].mxu0
      %v575 = vpop.f32.mrb[0].mxu0
      %v576 = vadd.f32 0.0, %v575
      %v577 = vpop.f32.mrb[0].mxu0
      %578 = vmatprep.mubr.bf16.mxu0 0
      %579 = vmatmul.mubr.bf16.gmra.mrb[0].mxu0 %v513
      %v580 = vpop.f32.mrb[0].mxu0
      %v581 = vadd.f32 0.0, %v580
      %v582 = vpop.f32.mrb[0].mxu0
      %v583 = vpop.f32.mrb[0].mxu0
      %v584 = vadd.f32 0.0, %v583
      %v585 = vpop.f32.mrb[0].mxu0
      %586 = vmatprep.mubr.bf16.mxu0 0
      %587 = vmatmul.mubr.bf16.gmra.mrb[0].mxu0 %v516
      %v588 = vpop.f32.mrb[0].mxu0
      %v589 = vadd.f32 0.0, %v588
      %v590 = vpop.f32.mrb[0].mxu0
      %v591 = vpop.f32.mrb[0].mxu0
      %v592 = vadd.f32 0.0, %v591
      %v593 = vpop.f32.mrb[0].mxu0
      %594 = vmatprep.mubr.bf16.mxu0 0
      %595 = vmatmul.mubr.bf16.gmra.mrb[0].mxu0 %v519
      %v596 = vpop.f32.mrb[0].mxu0
      %v597 = vadd.f32 0.0, %v596
      %v598 = vpop.f32.mrb[0].mxu0
      %v599 = vpop.f32.mrb[0].mxu0
      %v600 = vadd.f32 0.0, %v599
      %v601 = vpop.f32.mrb[0].mxu0
      %602 = vmatprep.mubr.bf16.mxu0 0
      %603 = vmatmul.mubr.bf16.gmra.mrb[0].mxu0 %v522
      %v604 = vpop.f32.mrb[0].mxu0
      %v605 = vadd.f32 0.0, %v604
      %v606 = vpop.f32.mrb[0].mxu0
      %v607 = vpop.f32.mrb[0].mxu0
      %v608 = vadd.f32 0.0, %v607
      %v609 = vpop.f32.mrb[0].mxu0
      %610 = vmatprep.mubr.bf16.mxu0 0
      %611 = vmatmul.mubr.bf16.gmra.mrb[0].mxu0 %v525
      %v612 = vpop.f32.mrb[0].mxu0
      %v613 = vadd.f32 0.0, %v612
      %v614 = vpop.f32.mrb[0].mxu0
      %v615 = vpop.f32.mrb[0].mxu0
      %v616 = vadd.f32 0.0, %v615
      %v617 = vpop.f32.mrb[0].mxu0
      %618 = vmatprep.mubr.bf16.mxu0 0
      %619 = vmatmul.mubr.bf16.gmra.mrb[0].mxu0 %v528
      %v620 = vpop.f32.mrb[0].mxu0
      %v621 = vadd.f32 0.0, %v620
      %v622 = vpop.f32.mrb[0].mxu0
      %v623 = vpop.f32.mrb[0].mxu0
      %v624 = vadd.f32 0.0, %v623
      %v625 = vpop.f32.mrb[0].mxu0
      %626 = vdwg.mxu0
      %v627 = vmul.f32 %v565, 0.1
      %v628 = vmul.f32 %v568, 0.1
      %v629 = vmul.f32 %v573, 0.1
      %v630 = vmul.f32 %v576, 0.1
      %v631 = vmul.f32 %v581, 0.1
      %v632 = vmul.f32 %v584, 0.1
      %v633 = vmul.f32 %v589, 0.1
      %v634 = vmul.f32 %v592, 0.1
      %v635 = vmul.f32 %v597, 0.1
      %v636 = vmul.f32 %v600, 0.1
      %v637 = vmul.f32 %v605, 0.1
      %v638 = vmul.f32 %v608, 0.1
      %v639 = vmul.f32 %v613, 0.1
      %v640 = vmul.f32 %v616, 0.1
      %v641 = vmul.f32 %v621, 0.1
      %v642 = vmul.f32 %v624, 0.1
      %v643 = vmax.f32 %v565, %v627
      %v644 = vmax.f32 %v568, %v628
      %v645 = vmax.f32 %v573, %v629
      %v646 = vmax.f32 %v576, %v630
      %v647 = vmax.f32 %v581, %v631
      %v648 = vmax.f32 %v584, %v632
      %v649 = vmax.f32 %v589, %v633
      %v650 = vmax.f32 %v592, %v634
      %v651 = vmax.f32 %v597, %v635
      %v652 = vmax.f32 %v600, %v636
      %v653 = vmax.f32 %v605, %v637
      %v654 = vmax.f32 %v608, %v638
      %v655 = vmax.f32 %v613, %v639
      %v656 = vmax.f32 %v616, %v640
      %v657 = vmax.f32 %v621, %v641
      %v658 = vmax.f32 %v624, %v642
      %vm659 = vcmask 130048
      %660 = vst.msk [vmem:[%s418] sm:$0xff] %vm659, %v643
      %661 = vst.msk [vmem:[%s418 + $0x8] sm:$0xff] %vm659, %v644
      %662 = vst.msk [vmem:[%s418 + $0x10] sm:$0xff] %vm659, %v645
      %663 = vst.msk [vmem:[%s418 + $0x18] sm:$0xff] %vm659, %v646
      %664 = vst.msk [vmem:[%s418 + $0x20] sm:$0xff] %vm659, %v647
      %665 = vst.msk [vmem:[%s418 + $0x28] sm:$0xff] %vm659, %v648
      %666 = vst.msk [vmem:[%s418 + $0x30] sm:$0xff] %vm659, %v649
      %667 = vst.msk [vmem:[%s418 + $0x38] sm:$0xff] %vm659, %v650
      %668 = vst.msk [vmem:[%s418 + $0x40] sm:$0xff] %vm659, %v651
      %669 = vst.msk [vmem:[%s418 + $0x48] sm:$0xff] %vm659, %v652
      %670 = vst.msk [vmem:[%s418 + $0x50] sm:$0xff] %vm659, %v653
      %671 = vst.msk [vmem:[%s418 + $0x58] sm:$0xff] %vm659, %v654
      %672 = vst.msk [vmem:[%s418 + $0x60] sm:$0xff] %vm659, %v655
      %673 = vst.msk [vmem:[%s418 + $0x68] sm:$0xff] %vm659, %v656
      %674 = vst.msk [vmem:[%s418 + $0x70] sm:$0xff] %vm659, %v657
      %675 = vst.msk [vmem:[%s418 + $0x78] sm:$0xff] %vm659, %v658
      %v676 = vld [vmem:[%s3] sm:$0xff]
      %v677 = vmul.f32 %v643, %v676
      %v678 = vmul.f32 %v644, %v676
      %v679 = vmul.f32 %v645, %v676
      %v680 = vmul.f32 %v646, %v676
      %v681 = vmul.f32 %v647, %v676
      %v682 = vmul.f32 %v648, %v676
      %v683 = vmul.f32 %v649, %v676
      %v684 = vmul.f32 %v650, %v676
      %v685 = vmul.f32 %v651, %v676
      %v686 = vmul.f32 %v652, %v676
      %v687 = vmul.f32 %v653, %v676
      %v688 = vmul.f32 %v654, %v676
      %v689 = vmul.f32 %v655, %v676
      %v690 = vmul.f32 %v656, %v676
      %v691 = vmul.f32 %v657, %v676
      %v692 = vmul.f32 %v658, %v676
      %v693 = vsel %vm659, %v677, 0.0
      %v694 = vrot.slane %v693, 4
      %v695 = vadd.f32 %v693, %v694
      %v696 = vrot.slane %v695, 2
      %v697 = vadd.f32 %v695, %v696
      %v698 = vrot.slane %v697, 1
      %v699 = vadd.f32 %v697, %v698
      %v700 = vsel %vm659, %v678, 0.0
      %v701 = vrot.slane %v700, 4
      %v702 = vadd.f32 %v700, %v701
      %v703 = vrot.slane %v702, 2
      %v704 = vadd.f32 %v702, %v703
      %v705 = vrot.slane %v704, 1
      %v706 = vadd.f32 %v704, %v705
      %v707 = vsel %vm659, %v679, 0.0
      %v708 = vrot.slane %v707, 4
      %v709 = vadd.f32 %v707, %v708
      %v710 = vrot.slane %v709, 2
      %v711 = vadd.f32 %v709, %v710
      %v712 = vrot.slane %v711, 1
      %v713 = vadd.f32 %v711, %v712
      %v714 = vsel %vm659, %v680, 0.0
      %v715 = vrot.slane %v714, 4
      %v716 = vadd.f32 %v714, %v715
      %v717 = vrot.slane %v716, 2
      %v718 = vadd.f32 %v716, %v717
      %v719 = vrot.slane %v718, 1
      %v720 = vadd.f32 %v718, %v719
      %v721 = vsel %vm659, %v681, 0.0
      %v722 = vrot.slane %v721, 4
      %v723 = vadd.f32 %v721, %v722
      %v724 = vrot.slane %v723, 2
      %v725 = vadd.f32 %v723, %v724
      %v726 = vrot.slane %v725, 1
      %v727 = vadd.f32 %v725, %v726
      %v728 = vsel %vm659, %v682, 0.0
      %v729 = vrot.slane %v728, 4
      %v730 = vadd.f32 %v728, %v729
      %v731 = vrot.slane %v730, 2
      %v732 = vadd.f32 %v730, %v731
      %v733 = vrot.slane %v732, 1
      %v734 = vadd.f32 %v732, %v733
      %v735 = vsel %vm659, %v683, 0.0
      %v736 = vrot.slane %v735, 4
      %v737 = vadd.f32 %v735, %v736
      %v738 = vrot.slane %v737, 2
      %v739 = vadd.f32 %v737, %v738
      %v740 = vrot.slane %v739, 1
      %v741 = vadd.f32 %v739, %v740
      %v742 = vsel %vm659, %v684, 0.0
      %v743 = vrot.slane %v742, 4
      %v744 = vadd.f32 %v742, %v743
      %v745 = vrot.slane %v744, 2
      %v746 = vadd.f32 %v744, %v745
      %v747 = vrot.slane %v746, 1
      %v748 = vadd.f32 %v746, %v747
      %v749 = vsel %vm659, %v685, 0.0
      %v750 = vrot.slane %v749, 4
      %v751 = vadd.f32 %v749, %v750
      %v752 = vrot.slane %v751, 2
      %v753 = vadd.f32 %v751, %v752
      %v754 = vrot.slane %v753, 1
      %v755 = vadd.f32 %v753, %v754
      %v756 = vsel %vm659, %v686, 0.0
      %v757 = vrot.slane %v756, 4
      %v758 = vadd.f32 %v756, %v757
      %v759 = vrot.slane %v758, 2
      %v760 = vadd.f32 %v758, %v759
      %v761 = vrot.slane %v760, 1
      %v762 = vadd.f32 %v760, %v761
      %v763 = vsel %vm659, %v687, 0.0
      %v764 = vrot.slane %v763, 4
      %v765 = vadd.f32 %v763, %v764
      %v766 = vrot.slane %v765, 2
      %v767 = vadd.f32 %v765, %v766
      %v768 = vrot.slane %v767, 1
      %v769 = vadd.f32 %v767, %v768
      %v770 = vsel %vm659, %v688, 0.0
      %v771 = vrot.slane %v770, 4
      %v772 = vadd.f32 %v770, %v771
      %v773 = vrot.slane %v772, 2
      %v774 = vadd.f32 %v772, %v773
      %v775 = vrot.slane %v774, 1
      %v776 = vadd.f32 %v774, %v775
      %v777 = vsel %vm659, %v689, 0.0
      %v778 = vrot.slane %v777, 4
      %v779 = vadd.f32 %v777, %v778
      %v780 = vrot.slane %v779, 2
      %v781 = vadd.f32 %v779, %v780
      %v782 = vrot.slane %v781, 1
      %v783 = vadd.f32 %v781, %v782
      %v784 = vsel %vm659, %v690, 0.0
      %v785 = vrot.slane %v784, 4
      %v786 = vadd.f32 %v784, %v785
      %v787 = vrot.slane %v786, 2
      %v788 = vadd.f32 %v786, %v787
      %v789 = vrot.slane %v788, 1
      %v790 = vadd.f32 %v788, %v789
      %v791 = vsel %vm659, %v691, 0.0
      %v792 = vrot.slane %v791, 4
      %v793 = vadd.f32 %v791, %v792
      %v794 = vrot.slane %v793, 2
      %v795 = vadd.f32 %v793, %v794
      %v796 = vrot.slane %v795, 1
      %v797 = vadd.f32 %v795, %v796
      %v798 = vsel %vm659, %v692, 0.0
      %v799 = vrot.slane %v798, 4
      %v800 = vadd.f32 %v798, %v799
      %v801 = vrot.slane %v800, 2
      %v802 = vadd.f32 %v800, %v801
      %v803 = vrot.slane %v802, 1
      %v804 = vadd.f32 %v802, %v803
      %v805 = vld [vmem:[#allocation2] sm:$0x1]
      %v807 = vlaneseq
      %v808 = vshrl.u32 %v807, 7
      %v809 = vsub.s32 0, %v808
      %v810 = vrot.slane %v805, %v809
      %811 = vset.pattern.permute.xlu0 0
      %812 = vperm.xlu0 %811, %v810
      %v813 = vpop.permute.xlu0 %812
      %v815 = vadd.f32 %v699, %v813
      %v816 = vadd.f32 %v706, %v813
      %v817 = vadd.f32 %v713, %v813
      %v818 = vadd.f32 %v720, %v813
      %v819 = vadd.f32 %v727, %v813
      %v820 = vadd.f32 %v734, %v813
      %v821 = vadd.f32 %v741, %v813
      %v822 = vadd.f32 %v748, %v813
      %v823 = vadd.f32 %v755, %v813
      %v824 = vadd.f32 %v762, %v813
      %v825 = vadd.f32 %v769, %v813
      %v826 = vadd.f32 %v776, %v813
      %v827 = vadd.f32 %v783, %v813
      %v828 = vadd.f32 %v790, %v813
      %v829 = vadd.f32 %v797, %v813
      %v830 = vadd.f32 %v804, %v813
      %vm847 = vcmask 1041409
      %v848 = vsel %vm847, %v816, %v815
      %vm849 = vcmask 1042434
      %v850 = vsel %vm849, %v817, %v848
      %vm851 = vcmask 1043459
      %v852 = vsel %vm851, %v818, %v850
      %vm853 = vcmask 1044484
      %v854 = vsel %vm853, %v819, %v852
      %vm855 = vcmask 1045509
      %v856 = vsel %vm855, %v820, %v854
      %vm857 = vcmask 1046534
      %v858 = vsel %vm857, %v821, %v856
      %vm859 = vcmask 1047559
      %v860 = vsel %vm859, %v822, %v858
      %v861 = vsel %vm847, %v824, %v823
      %v862 = vsel %vm849, %v825, %v861
      %v863 = vsel %vm851, %v826, %v862
      %v864 = vsel %vm853, %v827, %v863
      %v865 = vsel %vm855, %v828, %v864
      %v866 = vsel %vm857, %v829, %v865
      %v867 = vsel %vm859, %v830, %v866
      %870 = vst.msk [vmem:[%s430] sm:$0xff] %vm659, %v860
      %871 = vst.msk [vmem:[%s430 + $0x8] sm:$0xff] %vm659, %v867
      %v872 = vld [vmem:[%s5] sm:$0xff]
      %v873 = vmul.f32 %v815, %v872
      %v874 = vmul.f32 %v816, %v872
      %v875 = vmul.f32 %v817, %v872
      %v876 = vmul.f32 %v818, %v872
      %v877 = vmul.f32 %v819, %v872
      %v878 = vmul.f32 %v820, %v872
      %v879 = vmul.f32 %v821, %v872
      %v880 = vmul.f32 %v822, %v872
      %v881 = vmul.f32 %v823, %v872
      %v882 = vmul.f32 %v824, %v872
      %v883 = vmul.f32 %v825, %v872
      %v884 = vmul.f32 %v826, %v872
      %v885 = vmul.f32 %v827, %v872
      %v886 = vmul.f32 %v828, %v872
      %v887 = vmul.f32 %v829, %v872
      %v888 = vmul.f32 %v830, %v872
      %v889 = vld [vmem:[%s6] sm:$0xff]
      %v890 = vadd.f32 %v873, %v889
      %v891 = vadd.f32 %v874, %v889
      %v892 = vadd.f32 %v875, %v889
      %v893 = vadd.f32 %v876, %v889
      %v894 = vadd.f32 %v877, %v889
      %v895 = vadd.f32 %v878, %v889
      %v896 = vadd.f32 %v879, %v889
      %v897 = vadd.f32 %v880, %v889
      %v898 = vadd.f32 %v881, %v889
      %v899 = vadd.f32 %v882, %v889
      %v900 = vadd.f32 %v883, %v889
      %v901 = vadd.f32 %v884, %v889
      %v902 = vadd.f32 %v885, %v889
      %v903 = vadd.f32 %v886, %v889
      %v904 = vadd.f32 %v887, %v889
      %v905 = vadd.f32 %v888, %v889
      %v906 = vmul.f32 %v890, 0.1
      %v907 = vmul.f32 %v891, 0.1
      %v908 = vmul.f32 %v892, 0.1
      %v909 = vmul.f32 %v893, 0.1
      %v910 = vmul.f32 %v894, 0.1
      %v911 = vmul.f32 %v895, 0.1
      %v912 = vmul.f32 %v896, 0.1
      %v913 = vmul.f32 %v897, 0.1
      %v914 = vmul.f32 %v898, 0.1
      %v915 = vmul.f32 %v899, 0.1
      %v916 = vmul.f32 %v900, 0.1
      %v917 = vmul.f32 %v901, 0.1
      %v918 = vmul.f32 %v902, 0.1
      %v919 = vmul.f32 %v903, 0.1
      %v920 = vmul.f32 %v904, 0.1
      %v921 = vmul.f32 %v905, 0.1
      %v922 = vmax.f32 %v890, %v906
      %v923 = vmax.f32 %v891, %v907
      %v924 = vmax.f32 %v892, %v908
      %v925 = vmax.f32 %v893, %v909
      %v926 = vmax.f32 %v894, %v910
      %v927 = vmax.f32 %v895, %v911
      %v928 = vmax.f32 %v896, %v912
      %v929 = vmax.f32 %v897, %v913
      %v930 = vmax.f32 %v898, %v914
      %v931 = vmax.f32 %v899, %v915
      %v932 = vmax.f32 %v900, %v916
      %v933 = vmax.f32 %v901, %v917
      %v934 = vmax.f32 %v902, %v918
      %v935 = vmax.f32 %v903, %v919
      %v936 = vmax.f32 %v904, %v920
      %v937 = vmax.f32 %v905, %v921
      %938 = vst.msk [vmem:[%s424] sm:$0xff] %vm659, %v922
      %939 = vst.msk [vmem:[%s424 + $0x8] sm:$0xff] %vm659, %v923
      %940 = vst.msk [vmem:[%s424 + $0x10] sm:$0xff] %vm659, %v924
      %941 = vst.msk [vmem:[%s424 + $0x18] sm:$0xff] %vm659, %v925
      %942 = vst.msk [vmem:[%s424 + $0x20] sm:$0xff] %vm659, %v926
      %943 = vst.msk [vmem:[%s424 + $0x28] sm:$0xff] %vm659, %v927
      %944 = vst.msk [vmem:[%s424 + $0x30] sm:$0xff] %vm659, %v928
      %945 = vst.msk [vmem:[%s424 + $0x38] sm:$0xff] %vm659, %v929
      %946 = vst.msk [vmem:[%s424 + $0x40] sm:$0xff] %vm659, %v930
      %947 = vst.msk [vmem:[%s424 + $0x48] sm:$0xff] %vm659, %v931
      %948 = vst.msk [vmem:[%s424 + $0x50] sm:$0xff] %vm659, %v932
      %949 = vst.msk [vmem:[%s424 + $0x58] sm:$0xff] %vm659, %v933
      %950 = vst.msk [vmem:[%s424 + $0x60] sm:$0xff] %vm659, %v934
      %951 = vst.msk [vmem:[%s424 + $0x68] sm:$0xff] %vm659, %v935
      %952 = vst.msk [vmem:[%s424 + $0x70] sm:$0xff] %vm659, %v936
      %953 = vst.msk [vmem:[%s424 + $0x78] sm:$0xff] %vm659, %v937
      %v954 = vpack.c.bf16 %v923, %v922
      %v955 = vpack.c.bf16 %v925, %v924
      %v956 = vpack.c.bf16 %v927, %v926
      %v957 = vpack.c.bf16 %v929, %v928
      %v958 = vpack.c.bf16 %v931, %v930
      %v959 = vpack.c.bf16 %v933, %v932
      %v960 = vpack.c.bf16 %v935, %v934
      %v961 = vpack.c.bf16 %v937, %v936
      %v962 = vld [vmem:[%s2] sm:$0xf]
      %v963 = vld [vmem:[%s2 + $0x4] sm:$0xf]
      %v964 = vld [vmem:[%s7] sm:$0x1]
      %v966 = vlaneseq
      %v967 = vshrl.u32 %v966, 7
      %v968 = vsub.s32 0, %v967
      %v969 = vrot.slane %v964, %v968
      %v973 = vunpack.c.l.b16 %v962
      %v974 = vunpack.c.l.b16 %v963
      %v975 = vpack.c.b16 %v974, %v973
      %v978 = vsel %vm659, %v954, 0
      %v981 = vsel %vm659, %v955, 0
      %v984 = vsel %vm659, %v956, 0
      %v987 = vsel %vm659, %v957, 0
      %v990 = vsel %vm659, %v958, 0
      %v993 = vsel %vm659, %v959, 0
      %v996 = vsel %vm659, %v960, 0
      %v999 = vsel %vm659, %v961, 0
      %1001 = vmatprep.subr.bf16.mxu0 0
      %1002 = vmatpush1.bf16.msra.mxu0 %v975
      %1003 = vmatprep.subr.bf16.mxu0 0
      %1004 = vmatpush1.bf16.msra.mxu0 0
      %1005 = vmatprep.subr.bf16.mxu0 0
      %1006 = vmatpush1.bf16.msra.mxu0 0
      %1007 = vmatprep.subr.bf16.mxu0 0
      %1008 = vmatpush1.bf16.msra.mxu0 0
      %1009 = vmatprep.subr.bf16.mxu0 0
      %1010 = vmatpush1.bf16.msra.mxu0 0
      %1011 = vmatprep.subr.bf16.mxu0 0
      %1012 = vmatpush1.bf16.msra.mxu0 0
      %1013 = vmatprep.subr.bf16.mxu0 0
      %1014 = vmatpush1.bf16.msra.mxu0 0
      %1015 = vmatprep.subr.bf16.mxu0 0
      %1016 = vmatpush1.bf16.msra.mxu0 0
      %1017 = vmatprep.subr.bf16.mxu0 0
      %1018 = vmatpush1.bf16.msra.mxu0 0
      %1019 = vmatprep.subr.bf16.mxu0 0
      %1020 = vmatpush1.bf16.msra.mxu0 0
      %1021 = vmatprep.subr.bf16.mxu0 0
      %1022 = vmatpush1.bf16.msra.mxu0 0
      %1023 = vmatprep.subr.bf16.mxu0 0
      %1024 = vmatpush1.bf16.msra.mxu0 0
      %1025 = vmatprep.subr.bf16.mxu0 0
      %1026 = vmatpush1.bf16.msra.mxu0 0
      %1027 = vmatprep.subr.bf16.mxu0 0
      %1028 = vmatpush1.bf16.msra.mxu0 0
      %1029 = vmatprep.subr.bf16.mxu0 0
      %1030 = vmatpush1.bf16.msra.mxu0 0
      %1031 = vmatprep.subr.bf16.mxu0 0
      %1032 = vmatpush1.bf16.msra.mxu0 0
      %1033 = vmatprep.mubr.bf16.mxu0 0
      %1034 = vmatmul.mubr.bf16.gmra.mrb[0].mxu0 %v978
      %v1035 = vpop.f32.mrb[0].mxu0
      %v1036 = vadd.f32 %v969, %v1035
      %v1037 = vpop.f32.mrb[0].mxu0
      %v1038 = vpop.f32.mrb[0].mxu0
      %v1039 = vadd.f32 %v969, %v1038
      %v1040 = vpop.f32.mrb[0].mxu0
      %1041 = vmatprep.mubr.bf16.mxu0 0
      %1042 = vmatmul.mubr.bf16.gmra.mrb[0].mxu0 %v981
      %v1043 = vpop.f32.mrb[0].mxu0
      %v1044 = vadd.f32 %v969, %v1043
      %v1045 = vpop.f32.mrb[0].mxu0
      %v1046 = vpop.f32.mrb[0].mxu0
      %v1047 = vadd.f32 %v969, %v1046
      %v1048 = vpop.f32.mrb[0].mxu0
      %1049 = vmatprep.mubr.bf16.mxu0 0
      %1050 = vmatmul.mubr.bf16.gmra.mrb[0].mxu0 %v984
      %v1051 = vpop.f32.mrb[0].mxu0
      %v1052 = vadd.f32 %v969, %v1051
      %v1053 = vpop.f32.mrb[0].mxu0
      %v1054 = vpop.f32.mrb[0].mxu0
      %v1055 = vadd.f32 %v969, %v1054
      %v1056 = vpop.f32.mrb[0].mxu0
      %1057 = vmatprep.mubr.bf16.mxu0 0
      %1058 = vmatmul.mubr.bf16.gmra.mrb[0].mxu0 %v987
      %v1059 = vpop.f32.mrb[0].mxu0
      %v1060 = vadd.f32 %v969, %v1059
      %v1061 = vpop.f32.mrb[0].mxu0
      %v1062 = vpop.f32.mrb[0].mxu0
      %v1063 = vadd.f32 %v969, %v1062
      %v1064 = vpop.f32.mrb[0].mxu0
      %1065 = vmatprep.mubr.bf16.mxu0 0
      %1066 = vmatmul.mubr.bf16.gmra.mrb[0].mxu0 %v990
      %v1067 = vpop.f32.mrb[0].mxu0
      %v1068 = vadd.f32 %v969, %v1067
      %v1069 = vpop.f32.mrb[0].mxu0
      %v1070 = vpop.f32.mrb[0].mxu0
      %v1071 = vadd.f32 %v969, %v1070
      %v1072 = vpop.f32.mrb[0].mxu0
      %1073 = vmatprep.mubr.bf16.mxu0 0
      %1074 = vmatmul.mubr.bf16.gmra.mrb[0].mxu0 %v993
      %v1075 = vpop.f32.mrb[0].mxu0
      %v1076 = vadd.f32 %v969, %v1075
      %v1077 = vpop.f32.mrb[0].mxu0
      %v1078 = vpop.f32.mrb[0].mxu0
      %v1079 = vadd.f32 %v969, %v1078
      %v1080 = vpop.f32.mrb[0].mxu0
      %1081 = vmatprep.mubr.bf16.mxu0 0
      %1082 = vmatmul.mubr.bf16.gmra.mrb[0].mxu0 %v996
      %v1083 = vpop.f32.mrb[0].mxu0
      %v1084 = vadd.f32 %v969, %v1083
      %v1085 = vpop.f32.mrb[0].mxu0
      %v1086 = vpop.f32.mrb[0].mxu0
      %v1087 = vadd.f32 %v969, %v1086
      %v1088 = vpop.f32.mrb[0].mxu0
      %1089 = vmatprep.mubr.bf16.mxu0 0
      %1090 = vmatmul.mubr.bf16.gmra.mrb[0].mxu0 %v999
      %v1091 = vpop.f32.mrb[0].mxu0
      %v1092 = vadd.f32 %v969, %v1091
      %v1093 = vpop.f32.mrb[0].mxu0
      %v1094 = vpop.f32.mrb[0].mxu0
      %v1095 = vadd.f32 %v969, %v1094
      %v1096 = vpop.f32.mrb[0].mxu0
      %1097 = vdwg.mxu0
      %1098 = vst.msk [vmem:[%s412] sm:$0xff] %vm505, %v1036
      %1099 = vst.msk [vmem:[%s412 + $0x8] sm:$0xff] %vm505, %v1039
      %1100 = vst.msk [vmem:[%s412 + $0x10] sm:$0xff] %vm505, %v1044
      %1101 = vst.msk [vmem:[%s412 + $0x18] sm:$0xff] %vm505, %v1047
      %1102 = vst.msk [vmem:[%s412 + $0x20] sm:$0xff] %vm505, %v1052
      %1103 = vst.msk [vmem:[%s412 + $0x28] sm:$0xff] %vm505, %v1055
      %1104 = vst.msk [vmem:[%s412 + $0x30] sm:$0xff] %vm505, %v1060
      %1105 = vst.msk [vmem:[%s412 + $0x38] sm:$0xff] %vm505, %v1063
      %1106 = vst.msk [vmem:[%s412 + $0x40] sm:$0xff] %vm505, %v1068
      %1107 = vst.msk [vmem:[%s412 + $0x48] sm:$0xff] %vm505, %v1071
      %1108 = vst.msk [vmem:[%s412 + $0x50] sm:$0xff] %vm505, %v1076
      %1109 = vst.msk [vmem:[%s412 + $0x58] sm:$0xff] %vm505, %v1079
      %1110 = vst.msk [vmem:[%s412 + $0x60] sm:$0xff] %vm505, %v1084
      %1111 = vst.msk [vmem:[%s412 + $0x68] sm:$0xff] %vm505, %v1087
      %1112 = vst.msk [vmem:[%s412 + $0x70] sm:$0xff] %vm505, %v1092
      %1113 = vst.msk [vmem:[%s412 + $0x78] sm:$0xff] %vm505, %v1095
      %s1114 = smul.u32 16, %s25
      %p1115 = scmp.lt.s32.totalorder %s1114, 47
      %s1116 = scalar_select %p1115, %s1114, 47
      %s1117 = smul.addr %s1116, 8
      %s1118 = scalar_lea.vmem %s8, %s1117
      %s1119 = smul.u32 16, %s25
      %p1120 = scmp.lt.s32.totalorder %s1119, 47
      %s1121 = scalar_select %p1120, %s1119, 47
      %s1122 = smul.addr %s1121, 8
      %s1123 = scalar_lea.vmem %s9, %s1122
      %s1124 = smul.u32 16, %s25
      %p1125 = scmp.lt.s32.totalorder %s1124, 47
      %s1126 = scalar_select %p1125, %s1124, 47
      %s1127 = smul.addr %s1126, 8
      %s1128 = scalar_lea.vmem %s10, %s1127
      %s1129 = smul.u32 2, %s25
      %p1130 = scmp.lt.s32.totalorder %s1129, 5
      %s1131 = scalar_select %p1130, %s1129, 5
      %s1132 = smul.addr %s1131, 8
      %s1133 = scalar_lea.vmem %s11, %s1132
      // Predicated region
      $region53: #{tpu_custom_call.1} parent=51 // pred_check
        %p1134 = pneg %p216
      $region54: #{tpu_custom_call.1} parent=51 // pred_check_branch
        %1136 = sbr.rel (%p1134) target = $region56
      $region55: #{tpu_custom_call.1} parent=51 // pred_region
        %s1137 = smul.u32 16, %s25
      $region56: #{tpu_custom_call.1} parent=51 // pred_fallthru
        _
      // Predicated region
      $region57: #{tpu_custom_call.1} parent=51 // pred_check
        %p1138 = pneg %p242
      $region58: #{tpu_custom_call.1} parent=51 // pred_check_branch
        %1140 = sbr.rel (%p1138) target = $region60
      $region59: #{tpu_custom_call.1} parent=51 // pred_region
        %s1141 = smul.u32 16, %s25
      $region60: #{tpu_custom_call.1} parent=51 // pred_fallthru
        _
      // Predicated region
      $region61: #{tpu_custom_call.1} parent=51 // pred_check
        %p1142 = pneg %p268
      $region62: #{tpu_custom_call.1} parent=51 // pred_check_branch
        %1144 = sbr.rel (%p1142) target = $region64
      $region63: #{tpu_custom_call.1} parent=51 // pred_region
        %s1145 = smul.u32 16, %s25
      $region64: #{tpu_custom_call.1} parent=51 // pred_fallthru
        _
      // Predicated region
      $region65: #{tpu_custom_call.1} parent=51 // pred_check
        %p1146 = pneg %p294
      $region66: #{tpu_custom_call.1} parent=51 // pred_check_branch
        %1148 = sbr.rel (%p1146) target = $region68
      $region67: #{tpu_custom_call.1} parent=51 // pred_region
        %s1149 = smul.u32 2, %s25
      $region68: #{tpu_custom_call.1} parent=51 // pred_fallthru
        _
    $region52: #{tpu_custom_call.1} parent=5 // pred_fallthru
      _
    %p1150 = scmp.le.s32.totalorder 2, %s20
    // Predicated region
    $region69: #{tpu_custom_call.1} parent=5 // pred_check
      %p1151 = pneg %p1150
    $region70: #{tpu_custom_call.1} parent=5 // pred_check_branch
      %1153 = sbr.rel (%p1151) target = $region72
    $region71: #{tpu_custom_call.1} parent=5 // pred_region
      %s1154 = ssub.s32 %s20, 2
      // Predicated region
      $region73: #{tpu_custom_call.1} parent=71 // pred_check
        %p1155 = pneg %p222
      $region74: #{tpu_custom_call.1} parent=71 // pred_check_branch
        %1157 = sbr.rel (%p1155) target = $region76
      $region75: #{tpu_custom_call.1} parent=71 // pred_region
        %s1158 = smul.u32 16, %s26
        %p1159 = scmp.lt.s32.totalorder %s1158, 47
        %s1160 = scalar_select %p1159, %s1158, 47
        %s1161 = smul.addr %s1160, 8
        %s1162 = scalar_lea.vmem %s8, %s1161
      $region76: #{tpu_custom_call.1} parent=71 // pred_fallthru
        _
      // Predicated region
      $region77: #{tpu_custom_call.1} parent=71 // pred_check
        %p1163 = pneg %p248
      $region78: #{tpu_custom_call.1} parent=71 // pred_check_branch
        %1165 = sbr.rel (%p1163) target = $region80
      $region79: #{tpu_custom_call.1} parent=71 // pred_region
        %s1166 = smul.u32 16, %s26
        %p1167 = scmp.lt.s32.totalorder %s1166, 47
        %s1168 = scalar_select %p1167, %s1166, 47
        %s1169 = smul.addr %s1168, 8
        %s1170 = scalar_lea.vmem %s9, %s1169
      $region80: #{tpu_custom_call.1} parent=71 // pred_fallthru
        _
      // Predicated region
      $region81: #{tpu_custom_call.1} parent=71 // pred_check
        %p1171 = pneg %p274
      $region82: #{tpu_custom_call.1} parent=71 // pred_check_branch
        %1173 = sbr.rel (%p1171) target = $region84
      $region83: #{tpu_custom_call.1} parent=71 // pred_region
        %s1174 = smul.u32 16, %s26
        %p1175 = scmp.lt.s32.totalorder %s1174, 47
        %s1176 = scalar_select %p1175, %s1174, 47
        %s1177 = smul.addr %s1176, 8
        %s1178 = scalar_lea.vmem %s10, %s1177
      $region84: #{tpu_custom_call.1} parent=71 // pred_fallthru
        _
      // Predicated region
      $region85: #{tpu_custom_call.1} parent=71 // pred_check
        %p1179 = pneg %p300
      $region86: #{tpu_custom_call.1} parent=71 // pred_check_branch
        %1181 = sbr.rel (%p1179) target = $region88
      $region87: #{tpu_custom_call.1} parent=71 // pred_region
        %s1182 = smul.u32 2, %s26
        %p1183 = scmp.lt.s32.totalorder %s1182, 5
        %s1184 = scalar_select %p1183, %s1182, 5
        %s1185 = smul.addr %s1184, 8
        %s1186 = scalar_lea.vmem %s11, %s1185
      $region88: #{tpu_custom_call.1} parent=71 // pred_fallthru
        _
    $region72: #{tpu_custom_call.1} parent=5 // pred_fallthru
      _
  $region6: #{tpu_custom_call.1} parent=0 // loop_footer
    %s24 = sadd.s32 1, %s20
  $region7: #{tpu_custom_call.1} parent=0 // loop_footer_branch
    %19 = sbr.rel target = $region3
  $region8: #{tpu_custom_call.1} parent=0 // loop_exit
    _

</llo_original>
